<compile_context>
chip_gen: v5e
topology: v5e:2x2
jax: 0.10.0
libtpu: 0.0.40
codegen_flags: <defaults>
</compile_context>

<pallas_src>
import jax
import jax.numpy as jnp
from jax.experimental import pallas as pl
from jax.experimental.pallas import tpu as pltpu


def _round_up(x, m):
    return (x + m - 1) // m * m


def _vmem_limit_bytes(need_bytes):
    """Generation-aware VMEM cap: v5e/v6e have 128 MiB physical, v7x 64 MiB."""
    try:
        phys = pltpu.get_tpu_info().vmem_capacity_bytes
    except Exception:
        phys = 64 * 1024 * 1024  # conservative (v7x-sized) fallback
    return int(min(max(need_bytes, 32 * 1024 * 1024), 3 * phys // 4))


def _fused_conv_matmul_kernel(x_ref, w_ref, b_ref, o_ref):
    # x_ref: (1, TM, KC)  bf16  im2col patch rows for one (batch, row-tile)
    # w_ref: (KC, Co)     bf16  combined (branch-mean) conv weight
    # b_ref: (1, Co)      f32   combined (branch-mean) bias
    # o_ref: (1, TM, Co)  f32   output rows
    # Single MXU matmul with f32 accumulation in a local value (no VMEM
    # scratch RMW); bias folded into the single lane-dense store.
    acc = jnp.dot(x_ref[0], w_ref[...], preferred_element_type=jnp.float32)
    o_ref[0] = acc + b_ref[...]


def inception_block_v1_forward(x_nchw, weights, biases):
    """x_nchw: (B, Cin, H, W) f32 (PyTorch NCHW).
    weights[i]: (Cout, Cin, 2i+1, 2i+1) OIHW, biases[i]: (Cout,).
    Returns (B, Cout, H, W) f32, matching the PyTorch forward."""
    num_kernels = len(weights)
    K = 2 * (num_kernels - 1) + 1
    P = (K - 1) // 2
    B, Cin, H, W = x_nchw.shape
    Cout = weights[0].shape[0]

    M = H * W                        # output rows per batch element
    KKC = K * K * Cin                # compact contraction depth (484 here)
    KC = _round_up(KKC, 128)         # pad contraction ONCE (484 -> 512)
    Co = _round_up(Cout, 128)        # lane-dense output channels
    TM = min(512, _round_up(M, 8))   # row tile (sublane-aligned)
    Mp = _round_up(M, TM)

    # ---- parameter plumbing (runs once, plain JAX) ------------------------
    # Mean of zero-embedded branch weights == single KxK conv weight (exact).
    w_comb = jnp.zeros((K, K, Cin, Cout), jnp.float32)
    for i, w in enumerate(weights):
        k = 2 * i + 1
        off = P - i
        w_hwio = jnp.transpose(w.astype(jnp.float32), (2, 3, 1, 0))  # (k,k,Ci,Co)
        w_comb = w_comb.at[off:off + k, off:off + k, :, :].add(w_hwio)
    w_comb = w_comb / num_kernels
    w_flat = w_comb.reshape(KKC, Cout)                      # (kh, kw, c) major
    w_flat = jnp.pad(w_flat, ((0, KC - KKC), (0, Co - Cout))).astype(jnp.bfloat16)

    b_comb = sum(b.astype(jnp.float32) for b in biases) / num_kernels
    b_pad = jnp.pad(b_comb[None, :], ((0, 0), (0, Co - Cout)))        # (1, Co)

    # ---- im2col hoisted to the wrapper ------------------------------------
    # patches[b, h*W + w, kh*K*Cin + kw*Cin + c] = x_pad[b, h+kh, w+kw, c],
    # which matches w_flat's (kh, kw, c) ordering exactly (cross-correlation,
    # same as PyTorch Conv2d).
    # NOTE: for large Cin the K*K im2col blow-up gets big in HBM; a per-kh
    # strip variant (kw-unroll only, K matmuls) would be preferred there.
    x_nhwc = jnp.transpose(x_nchw, (0, 2, 3, 1)).astype(jnp.float32)
    x_sp = jnp.pad(x_nhwc, ((0, 0), (P, P), (P, P), (0, 0)))
    patches = jnp.stack(
        [jnp.stack([x_sp[:, kh:kh + H, kw:kw + W, :] for kw in range(K)], axis=3)
         for kh in range(K)],
        axis=3)                                             # (B, H, W, K, K, Cin)
    patches = patches.reshape(B, M, KKC)
    patches = jnp.pad(patches, ((0, 0), (0, Mp - M), (0, KC - KKC)))
    patches = patches.astype(jnp.bfloat16)

    # ---- Pallas call -------------------------------------------------------
    # Per-step VMEM estimate (double-buffered pipelined operands) + headroom.
    need = 2 * (TM * KC * 2 + KC * Co * 2 + Co * 4 + TM * Co * 4) + (1 << 20)

    out = pl.pallas_call(
        _fused_conv_matmul_kernel,
        out_shape=jax.ShapeDtypeStruct((B, Mp, Co), jnp.float32),
        grid_spec=pltpu.PrefetchScalarGridSpec(
            num_scalar_prefetch=0,
            grid=(B, Mp // TM),
            in_specs=[
                pl.BlockSpec((1, TM, KC), lambda b, m: (b, m, 0)),
                pl.BlockSpec((KC, Co), lambda b, m: (0, 0)),   # weight: resident
                pl.BlockSpec((1, Co), lambda b, m: (0, 0)),    # bias: resident
            ],
            out_specs=pl.BlockSpec((1, TM, Co), lambda b, m: (b, m, 0)),
        ),
        compiler_params=pltpu.CompilerParams(
            dimension_semantics=("parallel", "parallel"),
            vmem_limit_bytes=_vmem_limit_bytes(need)),
    )(patches, w_flat, b_pad)

    out = out[:, :M, :Cout].reshape(B, H, W, Cout)   # drop row/channel padding
    # TODO(synk): downstream TimesNet ops could consume padded NHWC (and bf16)
    # directly to save this slice+transpose HBM pass; kept NCHW/f32 to match
    # the PyTorch module's output exactly.
    return jnp.transpose(out, (0, 3, 1, 2))          # back to NCHW


def init_inception_params(key, in_channels, out_channels, num_kernels=6):
    """kaiming_normal_(mode='fan_out', nonlinearity='relu'), bias=0."""
    weights, biases = [], []
    keys = jax.random.split(key, num_kernels)
    for i in range(num_kernels):
        k = 2 * i + 1
        fan_out = out_channels * k * k
        std = (2.0 / fan_out) ** 0.5
        w = std * jax.random.normal(keys[i], (out_channels, in_channels, k, k),
                                    dtype=jnp.float32)
        b = jnp.zeros((out_channels,), jnp.float32)
        weights.append(w)
        biases.append(b)
    return weights, biases


def reference_forward(x_nchw, weights, biases):
    """Pure-JAX f32 reference matching the PyTorch forward exactly."""
    outs = []
    for i, (w, b) in enumerate(zip(weights, biases)):
        o = jax.lax.conv_general_dilated(
            x_nchw, w, window_strides=(1, 1), padding=[(i, i), (i, i)],
            dimension_numbers=("NCHW", "OIHW", "NCHW"))
        outs.append(o + b[None, :, None, None])
    return jnp.mean(jnp.stack(outs, axis=-1), axis=-1)


if __name__ == "__main__":
    key = jax.random.PRNGKey(0)
    k_x, k_p = jax.random.split(key)

    B, Cin, Cout, H, W = 2, 4, 8, 16, 16
    num_kernels = 6

    x = jax.random.normal(k_x, (B, Cin, H, W), dtype=jnp.float32)
    weights, biases = init_inception_params(k_p, Cin, Cout, num_kernels)

    fwd = jax.jit(inception_block_v1_forward)
    out = jax.block_until_ready(fwd(x, weights, biases))

    ref = reference_forward(x, weights, biases)
    assert out.shape == (B, Cout, H, W), out.shape
    max_err = float(jnp.max(jnp.abs(out - ref)))
    # bf16 activations/weights with f32 accumulation: deliberate precision
    # choice -> relaxed tolerance vs the f32 reference.
    assert jnp.allclose(out, ref, atol=3e-2, rtol=3e-2), max_err

    print("KERNEL_OK")
</pallas_src>

<mosaic_0001>
module attributes {stable_mosaic.version = 11 : i64} {
  func.func @_fused_conv_matmul_kernel(%arg0: i32, %arg1: i32, %arg2: memref<1x256x512xbf16, #tpu.memory_space<vmem>>, %arg3: memref<512x128xbf16, #tpu.memory_space<vmem>>, %arg4: memref<1x128xf32, #tpu.memory_space<vmem>>, %arg5: memref<1x256x128xf32, #tpu.memory_space<vmem>>) attributes {dimension_semantics = [#tpu.dimension_semantics<parallel>, #tpu.dimension_semantics<parallel>], iteration_bounds = array<i64: 2, 1>, scalar_prefetch = 0 : i64, scratch_operands = 0 : i64, tpu.core_type = #tpu.core_type<tc>, window_params = [{transform_indices = @transform_0, window_bounds = array<i64: 1, 256, 512>}, {pipeline_mode = #tpu.pipeline_mode<synchronous>, transform_indices = @transform_1, window_bounds = array<i64: 512, 128>}, {pipeline_mode = #tpu.pipeline_mode<synchronous>, transform_indices = @transform_2, window_bounds = array<i64: 1, 128>}, {transform_indices = @transform_3, window_bounds = array<i64: 1, 256, 128>}]} {
    %c0 = arith.constant 0 : index
    %c0_0 = arith.constant 0 : index
    %c0_1 = arith.constant 0 : index
    %0 = vector.load %arg2[%c0, %c0_0, %c0_1] : memref<1x256x512xbf16, #tpu.memory_space<vmem>>, vector<1x256x512xbf16>
    %1 = vector.shape_cast %0 : vector<1x256x512xbf16> to vector<256x512xbf16>
    %c0_2 = arith.constant 0 : index
    %c0_3 = arith.constant 0 : index
    %2 = vector.load %arg3[%c0_2, %c0_3] : memref<512x128xbf16, #tpu.memory_space<vmem>>, vector<512x128xbf16>
    %cst = arith.constant dense<0.000000e+00> : vector<256x128xf32>
    %3 = tpu.matmul %1, %2, %cst {dimension_numbers = #tpu.dot_dimension_numbers<[1], [0], [0], [1], [0, 0, 1, 1], [], []>} : vector<256x512xbf16>, vector<512x128xbf16>, vector<256x128xf32> -> vector<256x128xf32>
    %c0_4 = arith.constant 0 : index
    %c0_5 = arith.constant 0 : index
    %4 = vector.load %arg4[%c0_4, %c0_5] : memref<1x128xf32, #tpu.memory_space<vmem>>, vector<1x128xf32>
    %5 = vector.broadcast %4 : vector<1x128xf32> to vector<256x128xf32>
    %6 = arith.addf %3, %5 : vector<256x128xf32>
    %c0_6 = arith.constant 0 : index
    %c0_7 = arith.constant 0 : index
    %c0_8 = arith.constant 0 : index
    %7 = vector.load %arg5[%c0_6, %c0_7, %c0_8] : memref<1x256x128xf32, #tpu.memory_space<vmem>>, vector<1x256x128xf32>
    %8 = vector.shape_cast %7 : vector<1x256x128xf32> to vector<256x128xf32>
    %9 = vector.shape_cast %6 : vector<256x128xf32> to vector<1x256x128xf32>
    tpu.vector_store %arg5[%c0_6, %c0_7, %c0_8], %9 {strides = array<i32>} : memref<1x256x128xf32, #tpu.memory_space<vmem>>, vector<1x256x128xf32>,
    return
  }
  func.func @transform_0(%arg0: i32, %arg1: i32) -> (i32, i32, i32) {
    %c0_i32 = arith.constant 0 : i32
    %c0_i32_0 = arith.constant 0 : i32
    return %arg0, %arg1, %c0_i32 : i32, i32, i32
  }
  func.func @transform_1(%arg0: i32, %arg1: i32) -> (i32, i32) {
    %c0_i32 = arith.constant 0 : i32
    %c0_i32_0 = arith.constant 0 : i32
    %c0_i32_1 = arith.constant 0 : i32
    return %c0_i32, %c0_i32_0 : i32, i32
  }
  func.func @transform_2(%arg0: i32, %arg1: i32) -> (i32, i32) {
    %c0_i32 = arith.constant 0 : i32
    %c0_i32_0 = arith.constant 0 : i32
    %c0_i32_1 = arith.constant 0 : i32
    return %c0_i32, %c0_i32_0 : i32, i32
  }
  func.func @transform_3(%arg0: i32, %arg1: i32) -> (i32, i32, i32) {
    %c0_i32 = arith.constant 0 : i32
    %c0_i32_0 = arith.constant 0 : i32
    return %arg0, %arg1, %c0_i32 : i32, i32, i32
  }
}

</mosaic_0001>

<llo_original>
// kernel: inception_block_v1_forward.1
$region0: #{inception_block_v1_forward.1}
  #allocation0 [shape = 'u32[]', space=smem, size = 0x4, offset = 0x4, fixed_abs, tag = 'smem constant byte address 0x4 - core index']
  #allocation1 [shape = 'u32[72,128]{1,0:T(1,128)}', space=vmem, size = 0x9000, scoped, tag = 'internal scratch']
  %s0 = inlined_call_operand.vmem [shape: bf16[2,256,512], index: 0, kind: input, shape index: {}]
  %s1 = inlined_call_operand.vmem [shape: bf16[512,128], index: 1, kind: input, shape index: {}]
  %s2 = inlined_call_operand.vmem [shape: f32[1,128], index: 2, kind: input, shape index: {}]
  %s3 = inlined_call_operand.vmem [shape: f32[2,256,128], index: 3, kind: output, shape index: {}]
  %s4 = sld [smem:[#allocation0]]
  $region45: #{inception_block_v1_forward.1} parent=0
    _
  %s6 = ssub.s32 1, %s4
  %s7 = scalar_select 0, %s6, %s4
  loop: start=0, step=1, limit=4
  $region2: #{inception_block_v1_forward.1} parent=0 // loop_pre_header
    _
  $region3: #{inception_block_v1_forward.1} parent=0 // loop_header
    %s9 = sphi 0, %s13
    %p10 = scmp.ge.s32.totalorder %s9, 4
    %s16 = sphi 0, %s28
    %s17 = sphi 0, %s24
    %s18 = sphi 0, %s16
    %s19 = sphi 0, %s17
    %s20 = sphi 0, %s18
    %s21 = sphi 0, %s19
    %s33 = sphi 0, %s35
    %s36 = sphi 0, %s33
    %s37 = sphi 0, %s36
    %s53 = sphi 0, %s37
    %s57 = sphi 0, %s57
    %s59 = sphi 0, %s57
    %s60 = sphi 0, %s59
    %s74 = sphi 0, %s60
    %s78 = sphi 0, %s78
    %s80 = sphi 0, %s78
    %s81 = sphi 0, %s80
    %s95 = sphi 0, %s81
    %s103 = sphi 0, %s105
    %s106 = sphi 0, %s103
    %s107 = sphi 0, %s106
    %s123 = sphi 0, %s107
  $region4: #{inception_block_v1_forward.1} parent=0 // loop_header_branch
    %12 = sbr.rel (%p10) target = $region8
  $region5: #{inception_block_v1_forward.1} parent=0 // loop_body
    %s14 = ssub.s32 %s9, 1
    %s15 = ssub.s32 %s9, 2
    %s22 = sadd.s32 1, %s17
    %p23 = scmp.ge.s32.totalorder %s22, 1
    %s24 = scalar_select %p23, 0, %s22
    %s25 = sadd.s32 1, %s16
    %s26 = scalar_select %p23, %s25, %s16
    %p27 = scmp.ge.s32.totalorder %s26, 2
    %s28 = scalar_select %p27, 0, %s26
    %s29 = ssub.s32 %s16, %s28
    %s30 = ssub.s32 %s17, %s24
    %s31 = sor.u32 %s29, %s30
    %p32 = scmp.eq.s32.totalorder %s31, 0
    %s34 = sadd.s32 %s33, 1
    %s35 = scalar_select %p32, %s33, %s34
    %p38 = pneg %p32
    %p39 = scmp.eq.s32.totalorder %s9, 1
    %p40 = por %p38, %p39
    %p41 = scmp.ne.s32.totalorder %s33, %s36
    %p42 = scmp.eq.s32.totalorder %s9, 0
    %p43 = por %p41, %p42
    %p44 = scmp.ne.s32.totalorder %s33, %s36
    %p45 = scmp.eq.s32.totalorder %s14, 1
    %p46 = por %p44, %p45
    %p47 = scmp.ne.s32.totalorder %s36, %s37
    %p48 = scmp.eq.s32.totalorder %s14, 0
    %p49 = por %p47, %p48
    %p50 = scmp.ne.s32.totalorder %s36, %s37
    %p51 = scmp.eq.s32.totalorder %s15, 1
    %p52 = por %p50, %p51
    %p54 = scmp.ne.s32.totalorder %s37, %s53
    %p55 = scmp.eq.s32.totalorder %s15, 0
    %p56 = por %p54, %p55
    %s58 = sadd.s32 %s57, 1
    %p61 = scmp.eq.s32.totalorder %s9, 1
    %p62 = scmp.ne.s32.totalorder %s57, %s59
    %p63 = scmp.eq.s32.totalorder %s9, 0
    %p64 = por %p62, %p63
    %p65 = scmp.ne.s32.totalorder %s57, %s59
    %p66 = scmp.eq.s32.totalorder %s14, 1
    %p67 = por %p65, %p66
    %p68 = scmp.ne.s32.totalorder %s59, %s60
    %p69 = scmp.eq.s32.totalorder %s14, 0
    %p70 = por %p68, %p69
    %p71 = scmp.ne.s32.totalorder %s59, %s60
    %p72 = scmp.eq.s32.totalorder %s15, 1
    %p73 = por %p71, %p72
    %p75 = scmp.ne.s32.totalorder %s60, %s74
    %p76 = scmp.eq.s32.totalorder %s15, 0
    %p77 = por %p75, %p76
    %s79 = sadd.s32 %s78, 1
    %p82 = scmp.eq.s32.totalorder %s9, 1
    %p83 = scmp.ne.s32.totalorder %s78, %s80
    %p84 = scmp.eq.s32.totalorder %s9, 0
    %p85 = por %p83, %p84
    %p86 = scmp.ne.s32.totalorder %s78, %s80
    %p87 = scmp.eq.s32.totalorder %s14, 1
    %p88 = por %p86, %p87
    %p89 = scmp.ne.s32.totalorder %s80, %s81
    %p90 = scmp.eq.s32.totalorder %s14, 0
    %p91 = por %p89, %p90
    %p92 = scmp.ne.s32.totalorder %s80, %s81
    %p93 = scmp.eq.s32.totalorder %s15, 1
    %p94 = por %p92, %p93
    %p96 = scmp.ne.s32.totalorder %s81, %s95
    %p97 = scmp.eq.s32.totalorder %s15, 0
    %p98 = por %p96, %p97
    %s99 = ssub.s32 %s16, %s28
    %s100 = ssub.s32 %s17, %s24
    %s101 = sor.u32 %s99, %s100
    %p102 = scmp.eq.s32.totalorder %s101, 0
    %s104 = sadd.s32 %s103, 1
    %s105 = scalar_select %p102, %s103, %s104
    %p108 = pneg %p102
    %p109 = scmp.eq.s32.totalorder %s9, 1
    %p110 = por %p108, %p109
    %p111 = scmp.ne.s32.totalorder %s103, %s106
    %p112 = scmp.eq.s32.totalorder %s9, 0
    %p113 = por %p111, %p112
    %p114 = scmp.ne.s32.totalorder %s103, %s106
    %p115 = scmp.eq.s32.totalorder %s14, 1
    %p116 = por %p114, %p115
    %p117 = scmp.ne.s32.totalorder %s106, %s107
    %p118 = scmp.eq.s32.totalorder %s14, 0
    %p119 = por %p117, %p118
    %p120 = scmp.ne.s32.totalorder %s106, %s107
    %p121 = scmp.eq.s32.totalorder %s15, 1
    %p122 = por %p120, %p121
    %p124 = scmp.ne.s32.totalorder %s107, %s123
    %p125 = scmp.eq.s32.totalorder %s15, 0
    %p126 = por %p124, %p125
    %p127 = scmp.le.s32.totalorder 1, %s9
    %p128 = scmp.lt.s32.totalorder %s9, 3
    %p129 = pnand %p127, %p128
    %p130 = pneg %p129
    // Predicated region
    $region9: #{inception_block_v1_forward.1} parent=5 // pred_check
      _
    $region10: #{inception_block_v1_forward.1} parent=5 // pred_check_branch
      %132 = sbr.rel (%p129) target = $region12
    $region11: #{inception_block_v1_forward.1} parent=5 // pred_region
      %s133 = ssub.s32 %s9, 1
      // Predicated region
      $region13: #{inception_block_v1_forward.1} parent=11 // pred_check
        %p134 = pneg %p70
      $region14: #{inception_block_v1_forward.1} parent=11 // pred_check_branch
        %136 = sbr.rel (%p134) target = $region16
      $region15: #{inception_block_v1_forward.1} parent=11 // pred_region
        _
      $region16: #{inception_block_v1_forward.1} parent=11 // pred_fallthru
        _
      // Predicated region
      $region17: #{inception_block_v1_forward.1} parent=11 // pred_check
        %p137 = pneg %p91
      $region18: #{inception_block_v1_forward.1} parent=11 // pred_check_branch
        %139 = sbr.rel (%p137) target = $region20
      $region19: #{inception_block_v1_forward.1} parent=11 // pred_region
        _
      $region20: #{inception_block_v1_forward.1} parent=11 // pred_fallthru
        _
    $region12: #{inception_block_v1_forward.1} parent=5 // pred_fallthru
      _
    %p140 = scmp.lt.s32.totalorder %s9, 2
    // Predicated region
    $region21: #{inception_block_v1_forward.1} parent=5 // pred_check
      %p141 = pneg %p140
    $region22: #{inception_block_v1_forward.1} parent=5 // pred_check_branch
      %143 = sbr.rel (%p141) target = $region24
    $region23: #{inception_block_v1_forward.1} parent=5 // pred_region
      // Predicated region
      $region25: #{inception_block_v1_forward.1} parent=23 // pred_check
        %p144 = pneg %p43
      $region26: #{inception_block_v1_forward.1} parent=23 // pred_check_branch
        %146 = sbr.rel (%p144) target = $region28
      $region27: #{inception_block_v1_forward.1} parent=23 // pred_region
        %s147 = smul.u32 32, %s17
        %p148 = scmp.lt.s32.totalorder %s16, 1
        %s149 = scalar_select %p148, %s16, 1
        %p150 = scmp.lt.s32.totalorder %s147, 31
        %s151 = scalar_select %p150, %s147, 31
        %s152 = smul.addr %s151, 4
        %s153 = smul.addr %s149, 128
        %s154 = sadd.s32 %s152, %s153
        %s155 = smul.addr %s154, 4
        %s156 = scalar_lea.vmem %s0, %s155
        %s157 = smul.u32 32, %s17
      $region28: #{inception_block_v1_forward.1} parent=23 // pred_fallthru
        _
    $region24: #{inception_block_v1_forward.1} parent=5 // pred_fallthru
      _
    %p158 = scmp.le.s32.totalorder 1, %s9
    %p159 = scmp.lt.s32.totalorder %s9, 3
    %p160 = pnand %p158, %p159
    %p161 = pneg %p160
    // Predicated region
    $region29: #{inception_block_v1_forward.1} parent=5 // pred_check
      _
    $region30: #{inception_block_v1_forward.1} parent=5 // pred_check_branch
      %163 = sbr.rel (%p160) target = $region32
    $region31: #{inception_block_v1_forward.1} parent=5 // pred_region
      %s164 = ssub.s32 %s9, 1
      %s165 = smul.u32 32, %s19
      %p166 = scmp.lt.s32.totalorder %s18, 1
      %s167 = scalar_select %p166, %s18, 1
      %p168 = scmp.lt.s32.totalorder %s165, 31
      %s169 = scalar_select %p168, %s165, 31
      %s170 = smul.addr %s169, 4
      %s171 = smul.addr %s167, 128
      %s172 = sadd.s32 %s170, %s171
      %s173 = smul.addr %s172, 4
      %s174 = scalar_lea.vmem %s0, %s173
      %p175 = pneg %p49
      %p176 = pneg %p46
      %p177 = pneg %p70
      %p178 = pneg %p67
      %p179 = pneg %p91
      %p180 = pneg %p88
      %p181 = pneg %p119
      %p182 = pneg %p116
      %s183 = smul.u32 32, %s19
      %p184 = scmp.lt.s32.totalorder %s18, 1
      %s185 = scalar_select %p184, %s18, 1
      %p186 = scmp.lt.s32.totalorder %s183, 31
      %s187 = scalar_select %p186, %s183, 31
      %s188 = smul.addr %s185, 32
      %s189 = sadd.s32 %s187, %s188
      %s190 = smul.addr %s189, 8
      %s191 = scalar_lea.vmem %s3, %s190
      %s192 = smul.u32 32, %s19
      %p193 = scmp.lt.s32.totalorder %s18, 1
      %s194 = scalar_select %p193, %s18, 1
      %p195 = scmp.lt.s32.totalorder %s192, 31
      %s196 = scalar_select %p195, %s192, 31
      %s197 = smul.addr %s196, 4
      %s198 = smul.addr %s194, 128
      %s199 = sadd.s32 %s197, %s198
      %s200 = smul.addr %s199, 4
      %s201 = scalar_lea.vmem %s0, %s200
      %s202 = smul.u32 32, %s19
      %s203 = smul.u32 32, %s19
      %p204 = scmp.lt.s32.totalorder %s18, 1
      %s205 = scalar_select %p204, %s18, 1
      %p206 = scmp.lt.s32.totalorder %s203, 31
      %s207 = scalar_select %p206, %s203, 31
      %s208 = smul.addr %s205, 32
      %s209 = sadd.s32 %s207, %s208
      %s210 = smul.addr %s209, 8
      %s211 = scalar_lea.vmem %s3, %s210
      %s212 = smul.u32 32, %s19
      %v213 = vld [vmem:[%s201] sm:$0xff]
      %v214 = vld [vmem:[%s201 + $0x8] sm:$0xff]
      %v215 = vld [vmem:[%s201 + $0x10] sm:$0xff]
      %v216 = vld [vmem:[%s201 + $0x18] sm:$0xff]
      %v217 = vld [vmem:[%s201 + $0x20] sm:$0xff]
      %v218 = vld [vmem:[%s201 + $0x28] sm:$0xff]
      %v219 = vld [vmem:[%s201 + $0x30] sm:$0xff]
      %v220 = vld [vmem:[%s201 + $0x38] sm:$0xff]
      %v221 = vld [vmem:[%s201 + $0x40] sm:$0xff]
      %v222 = vld [vmem:[%s201 + $0x48] sm:$0xff]
      %v223 = vld [vmem:[%s201 + $0x50] sm:$0xff]
      %v224 = vld [vmem:[%s201 + $0x58] sm:$0xff]
      %v225 = vld [vmem:[%s201 + $0x60] sm:$0xff]
      %v226 = vld [vmem:[%s201 + $0x68] sm:$0xff]
      %v227 = vld [vmem:[%s201 + $0x70] sm:$0xff]
      %v228 = vld [vmem:[%s201 + $0x78] sm:$0xff]
      %v229 = vld [vmem:[%s201 + $0x80] sm:$0xff]
      %v230 = vld [vmem:[%s201 + $0x88] sm:$0xff]
      %v231 = vld [vmem:[%s201 + $0x90] sm:$0xff]
      %v232 = vld [vmem:[%s201 + $0x98] sm:$0xff]
      %v233 = vld [vmem:[%s201 + $0xa0] sm:$0xff]
      %v234 = vld [vmem:[%s201 + $0xa8] sm:$0xff]
      %v235 = vld [vmem:[%s201 + $0xb0] sm:$0xff]
      %v236 = vld [vmem:[%s201 + $0xb8] sm:$0xff]
      %v237 = vld [vmem:[%s201 + $0xc0] sm:$0xff]
      %v238 = vld [vmem:[%s201 + $0xc8] sm:$0xff]
      %v239 = vld [vmem:[%s201 + $0xd0] sm:$0xff]
      %v240 = vld [vmem:[%s201 + $0xd8] sm:$0xff]
      %v241 = vld [vmem:[%s201 + $0xe0] sm:$0xff]
      %v242 = vld [vmem:[%s201 + $0xe8] sm:$0xff]
      %v243 = vld [vmem:[%s201 + $0xf0] sm:$0xff]
      %v244 = vld [vmem:[%s201 + $0xf8] sm:$0xff]
      %v245 = vld [vmem:[%s201 + $0x100] sm:$0xff]
      %v246 = vld [vmem:[%s201 + $0x108] sm:$0xff]
      %v247 = vld [vmem:[%s201 + $0x110] sm:$0xff]
      %v248 = vld [vmem:[%s201 + $0x118] sm:$0xff]
      %v249 = vld [vmem:[%s201 + $0x120] sm:$0xff]
      %v250 = vld [vmem:[%s201 + $0x128] sm:$0xff]
      %v251 = vld [vmem:[%s201 + $0x130] sm:$0xff]
      %v252 = vld [vmem:[%s201 + $0x138] sm:$0xff]
      %v253 = vld [vmem:[%s201 + $0x140] sm:$0xff]
      %v254 = vld [vmem:[%s201 + $0x148] sm:$0xff]
      %v255 = vld [vmem:[%s201 + $0x150] sm:$0xff]
      %v256 = vld [vmem:[%s201 + $0x158] sm:$0xff]
      %v257 = vld [vmem:[%s201 + $0x160] sm:$0xff]
      %v258 = vld [vmem:[%s201 + $0x168] sm:$0xff]
      %v259 = vld [vmem:[%s201 + $0x170] sm:$0xff]
      %v260 = vld [vmem:[%s201 + $0x178] sm:$0xff]
      %v261 = vld [vmem:[%s201 + $0x180] sm:$0xff]
      %v262 = vld [vmem:[%s201 + $0x188] sm:$0xff]
      %v263 = vld [vmem:[%s201 + $0x190] sm:$0xff]
      %v264 = vld [vmem:[%s201 + $0x198] sm:$0xff]
      %v265 = vld [vmem:[%s201 + $0x1a0] sm:$0xff]
      %v266 = vld [vmem:[%s201 + $0x1a8] sm:$0xff]
      %v267 = vld [vmem:[%s201 + $0x1b0] sm:$0xff]
      %v268 = vld [vmem:[%s201 + $0x1b8] sm:$0xff]
      %v269 = vld [vmem:[%s201 + $0x1c0] sm:$0xff]
      %v270 = vld [vmem:[%s201 + $0x1c8] sm:$0xff]
      %v271 = vld [vmem:[%s201 + $0x1d0] sm:$0xff]
      %v272 = vld [vmem:[%s201 + $0x1d8] sm:$0xff]
      %v273 = vld [vmem:[%s201 + $0x1e0] sm:$0xff]
      %v274 = vld [vmem:[%s201 + $0x1e8] sm:$0xff]
      %v275 = vld [vmem:[%s201 + $0x1f0] sm:$0xff]
      %v276 = vld [vmem:[%s201 + $0x1f8] sm:$0xff]
      %v277 = vld [vmem:[%s1] sm:$0xf]
      %v278 = vld [vmem:[%s1 + $0x4] sm:$0xf]
      %v279 = vld [vmem:[%s1 + $0x8] sm:$0xf]
      %v280 = vld [vmem:[%s1 + $0xc] sm:$0xf]
      %v281 = vld [vmem:[%s1 + $0x10] sm:$0xf]
      %v282 = vld [vmem:[%s1 + $0x14] sm:$0xf]
      %v283 = vld [vmem:[%s1 + $0x18] sm:$0xf]
      %v284 = vld [vmem:[%s1 + $0x1c] sm:$0xf]
      %v285 = vld [vmem:[%s1 + $0x20] sm:$0xf]
      %v286 = vld [vmem:[%s1 + $0x24] sm:$0xf]
      %v287 = vld [vmem:[%s1 + $0x28] sm:$0xf]
      %v288 = vld [vmem:[%s1 + $0x2c] sm:$0xf]
      %v289 = vld [vmem:[%s1 + $0x30] sm:$0xf]
      %v290 = vld [vmem:[%s1 + $0x34] sm:$0xf]
      %v291 = vld [vmem:[%s1 + $0x38] sm:$0xf]
      %v292 = vld [vmem:[%s1 + $0x3c] sm:$0xf]
      %v293 = vld [vmem:[%s1 + $0x40] sm:$0xf]
      %v294 = vld [vmem:[%s1 + $0x44] sm:$0xf]
      %v295 = vld [vmem:[%s1 + $0x48] sm:$0xf]
      %v296 = vld [vmem:[%s1 + $0x4c] sm:$0xf]
      %v297 = vld [vmem:[%s1 + $0x50] sm:$0xf]
      %v298 = vld [vmem:[%s1 + $0x54] sm:$0xf]
      %v299 = vld [vmem:[%s1 + $0x58] sm:$0xf]
      %v300 = vld [vmem:[%s1 + $0x5c] sm:$0xf]
      %v301 = vld [vmem:[%s1 + $0x60] sm:$0xf]
      %v302 = vld [vmem:[%s1 + $0x64] sm:$0xf]
      %v303 = vld [vmem:[%s1 + $0x68] sm:$0xf]
      %v304 = vld [vmem:[%s1 + $0x6c] sm:$0xf]
      %v305 = vld [vmem:[%s1 + $0x70] sm:$0xf]
      %v306 = vld [vmem:[%s1 + $0x74] sm:$0xf]
      %v307 = vld [vmem:[%s1 + $0x78] sm:$0xf]
      %v308 = vld [vmem:[%s1 + $0x7c] sm:$0xf]
      %v309 = vld [vmem:[%s1 + $0x80] sm:$0xf]
      %v310 = vld [vmem:[%s1 + $0x84] sm:$0xf]
      %v311 = vld [vmem:[%s1 + $0x88] sm:$0xf]
      %v312 = vld [vmem:[%s1 + $0x8c] sm:$0xf]
      %v313 = vld [vmem:[%s1 + $0x90] sm:$0xf]
      %v314 = vld [vmem:[%s1 + $0x94] sm:$0xf]
      %v315 = vld [vmem:[%s1 + $0x98] sm:$0xf]
      %v316 = vld [vmem:[%s1 + $0x9c] sm:$0xf]
      %v317 = vld [vmem:[%s1 + $0xa0] sm:$0xf]
      %v318 = vld [vmem:[%s1 + $0xa4] sm:$0xf]
      %v319 = vld [vmem:[%s1 + $0xa8] sm:$0xf]
      %v320 = vld [vmem:[%s1 + $0xac] sm:$0xf]
      %v321 = vld [vmem:[%s1 + $0xb0] sm:$0xf]
      %v322 = vld [vmem:[%s1 + $0xb4] sm:$0xf]
      %v323 = vld [vmem:[%s1 + $0xb8] sm:$0xf]
      %v324 = vld [vmem:[%s1 + $0xbc] sm:$0xf]
      %v325 = vld [vmem:[%s1 + $0xc0] sm:$0xf]
      %v326 = vld [vmem:[%s1 + $0xc4] sm:$0xf]
      %v327 = vld [vmem:[%s1 + $0xc8] sm:$0xf]
      %v328 = vld [vmem:[%s1 + $0xcc] sm:$0xf]
      %v329 = vld [vmem:[%s1 + $0xd0] sm:$0xf]
      %v330 = vld [vmem:[%s1 + $0xd4] sm:$0xf]
      %v331 = vld [vmem:[%s1 + $0xd8] sm:$0xf]
      %v332 = vld [vmem:[%s1 + $0xdc] sm:$0xf]
      %v333 = vld [vmem:[%s1 + $0xe0] sm:$0xf]
      %v334 = vld [vmem:[%s1 + $0xe4] sm:$0xf]
      %v335 = vld [vmem:[%s1 + $0xe8] sm:$0xf]
      %v336 = vld [vmem:[%s1 + $0xec] sm:$0xf]
      %v337 = vld [vmem:[%s1 + $0xf0] sm:$0xf]
      %v338 = vld [vmem:[%s1 + $0xf4] sm:$0xf]
      %v339 = vld [vmem:[%s1 + $0xf8] sm:$0xf]
      %v340 = vld [vmem:[%s1 + $0xfc] sm:$0xf]
      %v341 = vld [vmem:[%s2] sm:$0x1]
      %v343 = vperm.slane %v341, 0
      %v409 = vunpack.c.l.b16 %v213
      %v410 = vunpack.c.h.b16 %v213
      %v411 = vunpack.c.l.b16 %v214
      %v412 = vunpack.c.h.b16 %v214
      %v413 = vunpack.c.l.b16 %v215
      %v414 = vunpack.c.h.b16 %v215
      %v415 = vunpack.c.l.b16 %v216
      %v416 = vunpack.c.h.b16 %v216
      %v417 = vunpack.c.l.b16 %v217
      %v418 = vunpack.c.h.b16 %v217
      %v419 = vunpack.c.l.b16 %v218
      %v420 = vunpack.c.h.b16 %v218
      %v421 = vunpack.c.l.b16 %v219
      %v422 = vunpack.c.h.b16 %v219
      %v423 = vunpack.c.l.b16 %v220
      %v424 = vunpack.c.h.b16 %v220
      %v425 = vunpack.c.l.b16 %v221
      %v426 = vunpack.c.h.b16 %v221
      %v427 = vunpack.c.l.b16 %v222
      %v428 = vunpack.c.h.b16 %v222
      %v429 = vunpack.c.l.b16 %v223
      %v430 = vunpack.c.h.b16 %v223
      %v431 = vunpack.c.l.b16 %v224
      %v432 = vunpack.c.h.b16 %v224
      %v433 = vunpack.c.l.b16 %v225
      %v434 = vunpack.c.h.b16 %v225
      %v435 = vunpack.c.l.b16 %v226
      %v436 = vunpack.c.h.b16 %v226
      %v437 = vunpack.c.l.b16 %v227
      %v438 = vunpack.c.h.b16 %v227
      %v439 = vunpack.c.l.b16 %v228
      %v440 = vunpack.c.h.b16 %v228
      %v441 = vunpack.c.l.b16 %v229
      %v442 = vunpack.c.h.b16 %v229
      %v443 = vunpack.c.l.b16 %v230
      %v444 = vunpack.c.h.b16 %v230
      %v445 = vunpack.c.l.b16 %v231
      %v446 = vunpack.c.h.b16 %v231
      %v447 = vunpack.c.l.b16 %v232
      %v448 = vunpack.c.h.b16 %v232
      %v449 = vunpack.c.l.b16 %v233
      %v450 = vunpack.c.h.b16 %v233
      %v451 = vunpack.c.l.b16 %v234
      %v452 = vunpack.c.h.b16 %v234
      %v453 = vunpack.c.l.b16 %v235
      %v454 = vunpack.c.h.b16 %v235
      %v455 = vunpack.c.l.b16 %v236
      %v456 = vunpack.c.h.b16 %v236
      %v457 = vunpack.c.l.b16 %v237
      %v458 = vunpack.c.h.b16 %v237
      %v459 = vunpack.c.l.b16 %v238
      %v460 = vunpack.c.h.b16 %v238
      %v461 = vunpack.c.l.b16 %v239
      %v462 = vunpack.c.h.b16 %v239
      %v463 = vunpack.c.l.b16 %v240
      %v464 = vunpack.c.h.b16 %v240
      %v465 = vunpack.c.l.b16 %v241
      %v466 = vunpack.c.h.b16 %v241
      %v467 = vunpack.c.l.b16 %v242
      %v468 = vunpack.c.h.b16 %v242
      %v469 = vunpack.c.l.b16 %v243
      %v470 = vunpack.c.h.b16 %v243
      %v471 = vunpack.c.l.b16 %v244
      %v472 = vunpack.c.h.b16 %v244
      %v473 = vunpack.c.l.b16 %v245
      %v474 = vunpack.c.h.b16 %v245
      %v475 = vunpack.c.l.b16 %v246
      %v476 = vunpack.c.h.b16 %v246
      %v477 = vunpack.c.l.b16 %v247
      %v478 = vunpack.c.h.b16 %v247
      %v479 = vunpack.c.l.b16 %v248
      %v480 = vunpack.c.h.b16 %v248
      %v481 = vunpack.c.l.b16 %v249
      %v482 = vunpack.c.h.b16 %v249
      %v483 = vunpack.c.l.b16 %v250
      %v484 = vunpack.c.h.b16 %v250
      %v485 = vunpack.c.l.b16 %v251
      %v486 = vunpack.c.h.b16 %v251
      %v487 = vunpack.c.l.b16 %v252
      %v488 = vunpack.c.h.b16 %v252
      %v489 = vunpack.c.l.b16 %v253
      %v490 = vunpack.c.h.b16 %v253
      %v491 = vunpack.c.l.b16 %v254
      %v492 = vunpack.c.h.b16 %v254
      %v493 = vunpack.c.l.b16 %v255
      %v494 = vunpack.c.h.b16 %v255
      %v495 = vunpack.c.l.b16 %v256
      %v496 = vunpack.c.h.b16 %v256
      %v497 = vunpack.c.l.b16 %v257
      %v498 = vunpack.c.h.b16 %v257
      %v499 = vunpack.c.l.b16 %v258
      %v500 = vunpack.c.h.b16 %v258
      %v501 = vunpack.c.l.b16 %v259
      %v502 = vunpack.c.h.b16 %v259
      %v503 = vunpack.c.l.b16 %v260
      %v504 = vunpack.c.h.b16 %v260
      %v505 = vunpack.c.l.b16 %v261
      %v506 = vunpack.c.h.b16 %v261
      %v507 = vunpack.c.l.b16 %v262
      %v508 = vunpack.c.h.b16 %v262
      %v509 = vunpack.c.l.b16 %v263
      %v510 = vunpack.c.h.b16 %v263
      %v511 = vunpack.c.l.b16 %v264
      %v512 = vunpack.c.h.b16 %v264
      %v513 = vunpack.c.l.b16 %v265
      %v514 = vunpack.c.h.b16 %v265
      %v515 = vunpack.c.l.b16 %v266
      %v516 = vunpack.c.h.b16 %v266
      %v517 = vunpack.c.l.b16 %v267
      %v518 = vunpack.c.h.b16 %v267
      %v519 = vunpack.c.l.b16 %v268
      %v520 = vunpack.c.h.b16 %v268
      %v521 = vunpack.c.l.b16 %v269
      %v522 = vunpack.c.h.b16 %v269
      %v523 = vunpack.c.l.b16 %v270
      %v524 = vunpack.c.h.b16 %v270
      %v525 = vunpack.c.l.b16 %v271
      %v526 = vunpack.c.h.b16 %v271
      %v527 = vunpack.c.l.b16 %v272
      %v528 = vunpack.c.h.b16 %v272
      %v529 = vunpack.c.l.b16 %v273
      %v530 = vunpack.c.h.b16 %v273
      %v531 = vunpack.c.l.b16 %v274
      %v532 = vunpack.c.h.b16 %v274
      %v533 = vunpack.c.l.b16 %v275
      %v534 = vunpack.c.h.b16 %v275
      %v535 = vunpack.c.l.b16 %v276
      %v536 = vunpack.c.h.b16 %v276
      %v537 = vpack.c.b16 %v413, %v409
      %v538 = vpack.c.b16 %v414, %v410
      %v539 = vpack.c.b16 %v415, %v411
      %v540 = vpack.c.b16 %v416, %v412
      %v541 = vpack.c.b16 %v421, %v417
      %v542 = vpack.c.b16 %v422, %v418
      %v543 = vpack.c.b16 %v423, %v419
      %v544 = vpack.c.b16 %v424, %v420
      %v545 = vpack.c.b16 %v429, %v425
      %v546 = vpack.c.b16 %v430, %v426
      %v547 = vpack.c.b16 %v431, %v427
      %v548 = vpack.c.b16 %v432, %v428
      %v549 = vpack.c.b16 %v437, %v433
      %v550 = vpack.c.b16 %v438, %v434
      %v551 = vpack.c.b16 %v439, %v435
      %v552 = vpack.c.b16 %v440, %v436
      %v553 = vpack.c.b16 %v445, %v441
      %v554 = vpack.c.b16 %v446, %v442
      %v555 = vpack.c.b16 %v447, %v443
      %v556 = vpack.c.b16 %v448, %v444
      %v557 = vpack.c.b16 %v453, %v449
      %v558 = vpack.c.b16 %v454, %v450
      %v559 = vpack.c.b16 %v455, %v451
      %v560 = vpack.c.b16 %v456, %v452
      %v561 = vpack.c.b16 %v461, %v457
      %v562 = vpack.c.b16 %v462, %v458
      %v563 = vpack.c.b16 %v463, %v459
      %v564 = vpack.c.b16 %v464, %v460
      %v565 = vpack.c.b16 %v469, %v465
      %v566 = vpack.c.b16 %v470, %v466
      %v567 = vpack.c.b16 %v471, %v467
      %v568 = vpack.c.b16 %v472, %v468
      %v569 = vpack.c.b16 %v477, %v473
      %v570 = vpack.c.b16 %v478, %v474
      %v571 = vpack.c.b16 %v479, %v475
      %v572 = vpack.c.b16 %v480, %v476
      %v573 = vpack.c.b16 %v485, %v481
      %v574 = vpack.c.b16 %v486, %v482
      %v575 = vpack.c.b16 %v487, %v483
      %v576 = vpack.c.b16 %v488, %v484
      %v577 = vpack.c.b16 %v493, %v489
      %v578 = vpack.c.b16 %v494, %v490
      %v579 = vpack.c.b16 %v495, %v491
      %v580 = vpack.c.b16 %v496, %v492
      %v581 = vpack.c.b16 %v501, %v497
      %v582 = vpack.c.b16 %v502, %v498
      %v583 = vpack.c.b16 %v503, %v499
      %v584 = vpack.c.b16 %v504, %v500
      %v585 = vpack.c.b16 %v509, %v505
      %v586 = vpack.c.b16 %v510, %v506
      %v587 = vpack.c.b16 %v511, %v507
      %v588 = vpack.c.b16 %v512, %v508
      %v589 = vpack.c.b16 %v517, %v513
      %v590 = vpack.c.b16 %v518, %v514
      %v591 = vpack.c.b16 %v519, %v515
      %v592 = vpack.c.b16 %v520, %v516
      %v593 = vpack.c.b16 %v525, %v521
      %v594 = vpack.c.b16 %v526, %v522
      %v595 = vpack.c.b16 %v527, %v523
      %v596 = vpack.c.b16 %v528, %v524
      %v597 = vpack.c.b16 %v533, %v529
      %v598 = vpack.c.b16 %v534, %v530
      %v599 = vpack.c.b16 %v535, %v531
      %v600 = vpack.c.b16 %v536, %v532
      %v729 = vunpack.c.l.b16 %v277
      %v730 = vunpack.c.l.b16 %v278
      %v731 = vunpack.c.l.b16 %v279
      %v732 = vunpack.c.l.b16 %v280
      %v733 = vunpack.c.l.b16 %v281
      %v734 = vunpack.c.l.b16 %v282
      %v735 = vunpack.c.l.b16 %v283
      %v736 = vunpack.c.l.b16 %v284
      %v737 = vunpack.c.l.b16 %v285
      %v738 = vunpack.c.l.b16 %v286
      %v739 = vunpack.c.l.b16 %v287
      %v740 = vunpack.c.l.b16 %v288
      %v741 = vunpack.c.l.b16 %v289
      %v742 = vunpack.c.l.b16 %v290
      %v743 = vunpack.c.l.b16 %v291
      %v744 = vunpack.c.l.b16 %v292
      %v745 = vunpack.c.l.b16 %v293
      %v746 = vunpack.c.l.b16 %v294
      %v747 = vunpack.c.l.b16 %v295
      %v748 = vunpack.c.l.b16 %v296
      %v749 = vunpack.c.l.b16 %v297
      %v750 = vunpack.c.l.b16 %v298
      %v751 = vunpack.c.l.b16 %v299
      %v752 = vunpack.c.l.b16 %v300
      %v753 = vunpack.c.l.b16 %v301
      %v754 = vunpack.c.l.b16 %v302
      %v755 = vunpack.c.l.b16 %v303
      %v756 = vunpack.c.l.b16 %v304
      %v757 = vunpack.c.l.b16 %v305
      %v758 = vunpack.c.l.b16 %v306
      %v759 = vunpack.c.l.b16 %v307
      %v760 = vunpack.c.l.b16 %v308
      %v761 = vunpack.c.l.b16 %v309
      %v762 = vunpack.c.l.b16 %v310
      %v763 = vunpack.c.l.b16 %v311
      %v764 = vunpack.c.l.b16 %v312
      %v765 = vunpack.c.l.b16 %v313
      %v766 = vunpack.c.l.b16 %v314
      %v767 = vunpack.c.l.b16 %v315
      %v768 = vunpack.c.l.b16 %v316
      %v769 = vunpack.c.l.b16 %v317
      %v770 = vunpack.c.l.b16 %v318
      %v771 = vunpack.c.l.b16 %v319
      %v772 = vunpack.c.l.b16 %v320
      %v773 = vunpack.c.l.b16 %v321
      %v774 = vunpack.c.l.b16 %v322
      %v775 = vunpack.c.l.b16 %v323
      %v776 = vunpack.c.l.b16 %v324
      %v777 = vunpack.c.l.b16 %v325
      %v778 = vunpack.c.l.b16 %v326
      %v779 = vunpack.c.l.b16 %v327
      %v780 = vunpack.c.l.b16 %v328
      %v781 = vunpack.c.l.b16 %v329
      %v782 = vunpack.c.l.b16 %v330
      %v783 = vunpack.c.l.b16 %v331
      %v784 = vunpack.c.l.b16 %v332
      %v785 = vunpack.c.l.b16 %v333
      %v786 = vunpack.c.l.b16 %v334
      %v787 = vunpack.c.l.b16 %v335
      %v788 = vunpack.c.l.b16 %v336
      %v789 = vunpack.c.l.b16 %v337
      %v790 = vunpack.c.l.b16 %v338
      %v791 = vunpack.c.l.b16 %v339
      %v792 = vunpack.c.l.b16 %v340
      %v793 = vpack.c.b16 %v730, %v729
      %v794 = vpack.c.b16 %v732, %v731
      %v795 = vpack.c.b16 %v734, %v733
      %v796 = vpack.c.b16 %v736, %v735
      %v797 = vpack.c.b16 %v738, %v737
      %v798 = vpack.c.b16 %v740, %v739
      %v799 = vpack.c.b16 %v742, %v741
      %v800 = vpack.c.b16 %v744, %v743
      %v801 = vpack.c.b16 %v746, %v745
      %v802 = vpack.c.b16 %v748, %v747
      %v803 = vpack.c.b16 %v750, %v749
      %v804 = vpack.c.b16 %v752, %v751
      %v805 = vpack.c.b16 %v754, %v753
      %v806 = vpack.c.b16 %v756, %v755
      %v807 = vpack.c.b16 %v758, %v757
      %v808 = vpack.c.b16 %v760, %v759
      %v809 = vpack.c.b16 %v762, %v761
      %v810 = vpack.c.b16 %v764, %v763
      %v811 = vpack.c.b16 %v766, %v765
      %v812 = vpack.c.b16 %v768, %v767
      %v813 = vpack.c.b16 %v770, %v769
      %v814 = vpack.c.b16 %v772, %v771
      %v815 = vpack.c.b16 %v774, %v773
      %v816 = vpack.c.b16 %v776, %v775
      %v817 = vpack.c.b16 %v778, %v777
      %v818 = vpack.c.b16 %v780, %v779
      %v819 = vpack.c.b16 %v782, %v781
      %v820 = vpack.c.b16 %v784, %v783
      %v821 = vpack.c.b16 %v786, %v785
      %v822 = vpack.c.b16 %v788, %v787
      %v823 = vpack.c.b16 %v790, %v789
      %v824 = vpack.c.b16 %v792, %v791
      %857 = vmatpush.bf16.msra.mxu0 %v800
      %858 = vmatpush.bf16.msra.mxu0 %v799
      %859 = vmatpush.bf16.msra.mxu0 %v798
      %860 = vmatpush.bf16.msra.mxu0 %v797
      %861 = vmatpush.bf16.msra.mxu0 %v796
      %862 = vmatpush.bf16.msra.mxu0 %v795
      %863 = vmatpush.bf16.msra.mxu0 %v794
      %864 = vmatpush.bf16.msra.mxu0 %v793
      %865 = vmatmul.bf16.gmra.mxu0 %v537
      %v866 = vpop.f32.mrf.mxu0
      %v867 = vadd.f32 %v343, %v866
      %v868 = vpop.f32.mrf.mxu0
      %v869 = vadd.f32 %v343, %v868
      %870 = vmatmul.bf16.gmra.mxu0 %v541
      %v871 = vpop.f32.mrf.mxu0
      %v872 = vadd.f32 %v343, %v871
      %v873 = vpop.f32.mrf.mxu0
      %v874 = vadd.f32 %v343, %v873
      %875 = vmatmul.bf16.gmra.mxu0 %v545
      %v876 = vpop.f32.mrf.mxu0
      %v877 = vadd.f32 %v343, %v876
      %v878 = vpop.f32.mrf.mxu0
      %v879 = vadd.f32 %v343, %v878
      %880 = vmatmul.bf16.gmra.mxu0 %v549
      %v881 = vpop.f32.mrf.mxu0
      %v882 = vadd.f32 %v343, %v881
      %v883 = vpop.f32.mrf.mxu0
      %v884 = vadd.f32 %v343, %v883
      %885 = vmatmul.bf16.gmra.mxu0 %v553
      %v886 = vpop.f32.mrf.mxu0
      %v887 = vadd.f32 %v343, %v886
      %v888 = vpop.f32.mrf.mxu0
      %v889 = vadd.f32 %v343, %v888
      %890 = vmatmul.bf16.gmra.mxu0 %v557
      %v891 = vpop.f32.mrf.mxu0
      %v892 = vadd.f32 %v343, %v891
      %v893 = vpop.f32.mrf.mxu0
      %v894 = vadd.f32 %v343, %v893
      %895 = vmatmul.bf16.gmra.mxu0 %v561
      %v896 = vpop.f32.mrf.mxu0
      %v897 = vadd.f32 %v343, %v896
      %v898 = vpop.f32.mrf.mxu0
      %v899 = vadd.f32 %v343, %v898
      %900 = vmatmul.bf16.gmra.mxu0 %v565
      %v901 = vpop.f32.mrf.mxu0
      %v902 = vadd.f32 %v343, %v901
      %v903 = vpop.f32.mrf.mxu0
      %v904 = vadd.f32 %v343, %v903
      %905 = vmatmul.bf16.gmra.mxu0 %v569
      %v906 = vpop.f32.mrf.mxu0
      %v907 = vadd.f32 %v343, %v906
      %v908 = vpop.f32.mrf.mxu0
      %v909 = vadd.f32 %v343, %v908
      %910 = vmatmul.bf16.gmra.mxu0 %v573
      %v911 = vpop.f32.mrf.mxu0
      %v912 = vadd.f32 %v343, %v911
      %v913 = vpop.f32.mrf.mxu0
      %v914 = vadd.f32 %v343, %v913
      %915 = vmatmul.bf16.gmra.mxu0 %v577
      %v916 = vpop.f32.mrf.mxu0
      %v917 = vadd.f32 %v343, %v916
      %v918 = vpop.f32.mrf.mxu0
      %v919 = vadd.f32 %v343, %v918
      %920 = vmatmul.bf16.gmra.mxu0 %v581
      %v921 = vpop.f32.mrf.mxu0
      %v922 = vadd.f32 %v343, %v921
      %v923 = vpop.f32.mrf.mxu0
      %v924 = vadd.f32 %v343, %v923
      %925 = vmatmul.bf16.gmra.mxu0 %v585
      %v926 = vpop.f32.mrf.mxu0
      %v927 = vadd.f32 %v343, %v926
      %v928 = vpop.f32.mrf.mxu0
      %v929 = vadd.f32 %v343, %v928
      %930 = vmatmul.bf16.gmra.mxu0 %v589
      %v931 = vpop.f32.mrf.mxu0
      %v932 = vadd.f32 %v343, %v931
      %v933 = vpop.f32.mrf.mxu0
      %v934 = vadd.f32 %v343, %v933
      %935 = vmatmul.bf16.gmra.mxu0 %v593
      %v936 = vpop.f32.mrf.mxu0
      %v937 = vadd.f32 %v343, %v936
      %v938 = vpop.f32.mrf.mxu0
      %v939 = vadd.f32 %v343, %v938
      %940 = vmatmul.bf16.gmra.mxu0 %v597
      %v941 = vpop.f32.mrf.mxu0
      %v942 = vadd.f32 %v343, %v941
      %v943 = vpop.f32.mrf.mxu0
      %v944 = vadd.f32 %v343, %v943
      %945 = vdwg.mxu0
      %946 = vmatpush.bf16.msra.mxu0 %v808
      %947 = vmatpush.bf16.msra.mxu0 %v807
      %948 = vmatpush.bf16.msra.mxu0 %v806
      %949 = vmatpush.bf16.msra.mxu0 %v805
      %950 = vmatpush.bf16.msra.mxu0 %v804
      %951 = vmatpush.bf16.msra.mxu0 %v803
      %952 = vmatpush.bf16.msra.mxu0 %v802
      %953 = vmatpush.bf16.msra.mxu0 %v801
      %954 = vmatmul.bf16.gmra.mxu0 %v538
      %v955 = vpop.f32.mrf.mxu0
      %v956 = vadd.f32 %v867, %v955
      %v957 = vpop.f32.mrf.mxu0
      %v958 = vadd.f32 %v869, %v957
      %959 = vmatmul.bf16.gmra.mxu0 %v542
      %v960 = vpop.f32.mrf.mxu0
      %v961 = vadd.f32 %v872, %v960
      %v962 = vpop.f32.mrf.mxu0
      %v963 = vadd.f32 %v874, %v962
      %964 = vmatmul.bf16.gmra.mxu0 %v546
      %v965 = vpop.f32.mrf.mxu0
      %v966 = vadd.f32 %v877, %v965
      %v967 = vpop.f32.mrf.mxu0
      %v968 = vadd.f32 %v879, %v967
      %969 = vmatmul.bf16.gmra.mxu0 %v550
      %v970 = vpop.f32.mrf.mxu0
      %v971 = vadd.f32 %v882, %v970
      %v972 = vpop.f32.mrf.mxu0
      %v973 = vadd.f32 %v884, %v972
      %974 = vmatmul.bf16.gmra.mxu0 %v554
      %v975 = vpop.f32.mrf.mxu0
      %v976 = vadd.f32 %v887, %v975
      %v977 = vpop.f32.mrf.mxu0
      %v978 = vadd.f32 %v889, %v977
      %979 = vmatmul.bf16.gmra.mxu0 %v558
      %v980 = vpop.f32.mrf.mxu0
      %v981 = vadd.f32 %v892, %v980
      %v982 = vpop.f32.mrf.mxu0
      %v983 = vadd.f32 %v894, %v982
      %984 = vmatmul.bf16.gmra.mxu0 %v562
      %v985 = vpop.f32.mrf.mxu0
      %v986 = vadd.f32 %v897, %v985
      %v987 = vpop.f32.mrf.mxu0
      %v988 = vadd.f32 %v899, %v987
      %989 = vmatmul.bf16.gmra.mxu0 %v566
      %v990 = vpop.f32.mrf.mxu0
      %v991 = vadd.f32 %v902, %v990
      %v992 = vpop.f32.mrf.mxu0
      %v993 = vadd.f32 %v904, %v992
      %994 = vmatmul.bf16.gmra.mxu0 %v570
      %v995 = vpop.f32.mrf.mxu0
      %v996 = vadd.f32 %v907, %v995
      %v997 = vpop.f32.mrf.mxu0
      %v998 = vadd.f32 %v909, %v997
      %999 = vmatmul.bf16.gmra.mxu0 %v574
      %v1000 = vpop.f32.mrf.mxu0
      %v1001 = vadd.f32 %v912, %v1000
      %v1002 = vpop.f32.mrf.mxu0
      %v1003 = vadd.f32 %v914, %v1002
      %1004 = vmatmul.bf16.gmra.mxu0 %v578
      %v1005 = vpop.f32.mrf.mxu0
      %v1006 = vadd.f32 %v917, %v1005
      %v1007 = vpop.f32.mrf.mxu0
      %v1008 = vadd.f32 %v919, %v1007
      %1009 = vmatmul.bf16.gmra.mxu0 %v582
      %v1010 = vpop.f32.mrf.mxu0
      %v1011 = vadd.f32 %v922, %v1010
      %v1012 = vpop.f32.mrf.mxu0
      %v1013 = vadd.f32 %v924, %v1012
      %1014 = vmatmul.bf16.gmra.mxu0 %v586
      %v1015 = vpop.f32.mrf.mxu0
      %v1016 = vadd.f32 %v927, %v1015
      %v1017 = vpop.f32.mrf.mxu0
      %v1018 = vadd.f32 %v929, %v1017
      %1019 = vmatmul.bf16.gmra.mxu0 %v590
      %v1020 = vpop.f32.mrf.mxu0
      %v1021 = vadd.f32 %v932, %v1020
      %v1022 = vpop.f32.mrf.mxu0
      %v1023 = vadd.f32 %v934, %v1022
      %1024 = vmatmul.bf16.gmra.mxu0 %v594
      %v1025 = vpop.f32.mrf.mxu0
      %v1026 = vadd.f32 %v937, %v1025
      %v1027 = vpop.f32.mrf.mxu0
      %v1028 = vadd.f32 %v939, %v1027
      %1029 = vmatmul.bf16.gmra.mxu0 %v598
      %v1030 = vpop.f32.mrf.mxu0
      %v1031 = vadd.f32 %v942, %v1030
      %v1032 = vpop.f32.mrf.mxu0
      %v1033 = vadd.f32 %v944, %v1032
      %1034 = vdwg.mxu0
      %1035 = vmatpush.bf16.msra.mxu0 %v816
      %1036 = vmatpush.bf16.msra.mxu0 %v815
      %1037 = vmatpush.bf16.msra.mxu0 %v814
      %1038 = vmatpush.bf16.msra.mxu0 %v813
      %1039 = vmatpush.bf16.msra.mxu0 %v812
      %1040 = vmatpush.bf16.msra.mxu0 %v811
      %1041 = vmatpush.bf16.msra.mxu0 %v810
      %1042 = vmatpush.bf16.msra.mxu0 %v809
      %1043 = vmatmul.bf16.gmra.mxu0 %v539
      %v1044 = vpop.f32.mrf.mxu0
      %v1045 = vadd.f32 %v956, %v1044
      %v1046 = vpop.f32.mrf.mxu0
      %v1047 = vadd.f32 %v958, %v1046
      %1048 = vmatmul.bf16.gmra.mxu0 %v543
      %v1049 = vpop.f32.mrf.mxu0
      %v1050 = vadd.f32 %v961, %v1049
      %v1051 = vpop.f32.mrf.mxu0
      %v1052 = vadd.f32 %v963, %v1051
      %1053 = vmatmul.bf16.gmra.mxu0 %v547
      %v1054 = vpop.f32.mrf.mxu0
      %v1055 = vadd.f32 %v966, %v1054
      %v1056 = vpop.f32.mrf.mxu0
      %v1057 = vadd.f32 %v968, %v1056
      %1058 = vmatmul.bf16.gmra.mxu0 %v551
      %v1059 = vpop.f32.mrf.mxu0
      %v1060 = vadd.f32 %v971, %v1059
      %v1061 = vpop.f32.mrf.mxu0
      %v1062 = vadd.f32 %v973, %v1061
      %1063 = vmatmul.bf16.gmra.mxu0 %v555
      %v1064 = vpop.f32.mrf.mxu0
      %v1065 = vadd.f32 %v976, %v1064
      %v1066 = vpop.f32.mrf.mxu0
      %v1067 = vadd.f32 %v978, %v1066
      %1068 = vmatmul.bf16.gmra.mxu0 %v559
      %v1069 = vpop.f32.mrf.mxu0
      %v1070 = vadd.f32 %v981, %v1069
      %v1071 = vpop.f32.mrf.mxu0
      %v1072 = vadd.f32 %v983, %v1071
      %1073 = vmatmul.bf16.gmra.mxu0 %v563
      %v1074 = vpop.f32.mrf.mxu0
      %v1075 = vadd.f32 %v986, %v1074
      %v1076 = vpop.f32.mrf.mxu0
      %v1077 = vadd.f32 %v988, %v1076
      %1078 = vmatmul.bf16.gmra.mxu0 %v567
      %v1079 = vpop.f32.mrf.mxu0
      %v1080 = vadd.f32 %v991, %v1079
      %v1081 = vpop.f32.mrf.mxu0
      %v1082 = vadd.f32 %v993, %v1081
      %1083 = vmatmul.bf16.gmra.mxu0 %v571
      %v1084 = vpop.f32.mrf.mxu0
      %v1085 = vadd.f32 %v996, %v1084
      %v1086 = vpop.f32.mrf.mxu0
      %v1087 = vadd.f32 %v998, %v1086
      %1088 = vmatmul.bf16.gmra.mxu0 %v575
      %v1089 = vpop.f32.mrf.mxu0
      %v1090 = vadd.f32 %v1001, %v1089
      %v1091 = vpop.f32.mrf.mxu0
      %v1092 = vadd.f32 %v1003, %v1091
      %1093 = vmatmul.bf16.gmra.mxu0 %v579
      %v1094 = vpop.f32.mrf.mxu0
      %v1095 = vadd.f32 %v1006, %v1094
      %v1096 = vpop.f32.mrf.mxu0
      %v1097 = vadd.f32 %v1008, %v1096
      %1098 = vmatmul.bf16.gmra.mxu0 %v583
      %v1099 = vpop.f32.mrf.mxu0
      %v1100 = vadd.f32 %v1011, %v1099
      %v1101 = vpop.f32.mrf.mxu0
      %v1102 = vadd.f32 %v1013, %v1101
      %1103 = vmatmul.bf16.gmra.mxu0 %v587
      %v1104 = vpop.f32.mrf.mxu0
      %v1105 = vadd.f32 %v1016, %v1104
      %v1106 = vpop.f32.mrf.mxu0
      %v1107 = vadd.f32 %v1018, %v1106
      %1108 = vmatmul.bf16.gmra.mxu0 %v591
      %v1109 = vpop.f32.mrf.mxu0
      %v1110 = vadd.f32 %v1021, %v1109
      %v1111 = vpop.f32.mrf.mxu0
      %v1112 = vadd.f32 %v1023, %v1111
      %1113 = vmatmul.bf16.gmra.mxu0 %v595
      %v1114 = vpop.f32.mrf.mxu0
      %v1115 = vadd.f32 %v1026, %v1114
      %v1116 = vpop.f32.mrf.mxu0
      %v1117 = vadd.f32 %v1028, %v1116
      %1118 = vmatmul.bf16.gmra.mxu0 %v599
      %v1119 = vpop.f32.mrf.mxu0
      %v1120 = vadd.f32 %v1031, %v1119
      %v1121 = vpop.f32.mrf.mxu0
      %v1122 = vadd.f32 %v1033, %v1121
      %1123 = vdwg.mxu0
      %1124 = vmatpush.bf16.msra.mxu0 %v824
      %1125 = vmatpush.bf16.msra.mxu0 %v823
      %1126 = vmatpush.bf16.msra.mxu0 %v822
      %1127 = vmatpush.bf16.msra.mxu0 %v821
      %1128 = vmatpush.bf16.msra.mxu0 %v820
      %1129 = vmatpush.bf16.msra.mxu0 %v819
      %1130 = vmatpush.bf16.msra.mxu0 %v818
      %1131 = vmatpush.bf16.msra.mxu0 %v817
      %1132 = vmatmul.bf16.gmra.mxu0 %v540
      %v1133 = vpop.f32.mrf.mxu0
      %v1134 = vadd.f32 %v1045, %v1133
      %v1135 = vpop.f32.mrf.mxu0
      %v1136 = vadd.f32 %v1047, %v1135
      %1137 = vmatmul.bf16.gmra.mxu0 %v544
      %v1138 = vpop.f32.mrf.mxu0
      %v1139 = vadd.f32 %v1050, %v1138
      %v1140 = vpop.f32.mrf.mxu0
      %v1141 = vadd.f32 %v1052, %v1140
      %1142 = vmatmul.bf16.gmra.mxu0 %v548
      %v1143 = vpop.f32.mrf.mxu0
      %v1144 = vadd.f32 %v1055, %v1143
      %v1145 = vpop.f32.mrf.mxu0
      %v1146 = vadd.f32 %v1057, %v1145
      %1147 = vmatmul.bf16.gmra.mxu0 %v552
      %v1148 = vpop.f32.mrf.mxu0
      %v1149 = vadd.f32 %v1060, %v1148
      %v1150 = vpop.f32.mrf.mxu0
      %v1151 = vadd.f32 %v1062, %v1150
      %1152 = vmatmul.bf16.gmra.mxu0 %v556
      %v1153 = vpop.f32.mrf.mxu0
      %v1154 = vadd.f32 %v1065, %v1153
      %v1155 = vpop.f32.mrf.mxu0
      %v1156 = vadd.f32 %v1067, %v1155
      %1157 = vmatmul.bf16.gmra.mxu0 %v560
      %v1158 = vpop.f32.mrf.mxu0
      %v1159 = vadd.f32 %v1070, %v1158
      %v1160 = vpop.f32.mrf.mxu0
      %v1161 = vadd.f32 %v1072, %v1160
      %1162 = vmatmul.bf16.gmra.mxu0 %v564
      %v1163 = vpop.f32.mrf.mxu0
      %v1164 = vadd.f32 %v1075, %v1163
      %v1165 = vpop.f32.mrf.mxu0
      %v1166 = vadd.f32 %v1077, %v1165
      %1167 = vmatmul.bf16.gmra.mxu0 %v568
      %v1168 = vpop.f32.mrf.mxu0
      %v1169 = vadd.f32 %v1080, %v1168
      %v1170 = vpop.f32.mrf.mxu0
      %v1171 = vadd.f32 %v1082, %v1170
      %1172 = vmatmul.bf16.gmra.mxu0 %v572
      %v1173 = vpop.f32.mrf.mxu0
      %v1174 = vadd.f32 %v1085, %v1173
      %v1175 = vpop.f32.mrf.mxu0
      %v1176 = vadd.f32 %v1087, %v1175
      %1177 = vmatmul.bf16.gmra.mxu0 %v576
      %v1178 = vpop.f32.mrf.mxu0
      %v1179 = vadd.f32 %v1090, %v1178
      %v1180 = vpop.f32.mrf.mxu0
      %v1181 = vadd.f32 %v1092, %v1180
      %1182 = vmatmul.bf16.gmra.mxu0 %v580
      %v1183 = vpop.f32.mrf.mxu0
      %v1184 = vadd.f32 %v1095, %v1183
      %v1185 = vpop.f32.mrf.mxu0
      %v1186 = vadd.f32 %v1097, %v1185
      %1187 = vmatmul.bf16.gmra.mxu0 %v584
      %v1188 = vpop.f32.mrf.mxu0
      %v1189 = vadd.f32 %v1100, %v1188
      %v1190 = vpop.f32.mrf.mxu0
      %v1191 = vadd.f32 %v1102, %v1190
      %1192 = vmatmul.bf16.gmra.mxu0 %v588
      %v1193 = vpop.f32.mrf.mxu0
      %v1194 = vadd.f32 %v1105, %v1193
      %v1195 = vpop.f32.mrf.mxu0
      %v1196 = vadd.f32 %v1107, %v1195
      %1197 = vmatmul.bf16.gmra.mxu0 %v592
      %v1198 = vpop.f32.mrf.mxu0
      %v1199 = vadd.f32 %v1110, %v1198
      %v1200 = vpop.f32.mrf.mxu0
      %v1201 = vadd.f32 %v1112, %v1200
      %1202 = vmatmul.bf16.gmra.mxu0 %v596
      %v1203 = vpop.f32.mrf.mxu0
      %v1204 = vadd.f32 %v1115, %v1203
      %v1205 = vpop.f32.mrf.mxu0
      %v1206 = vadd.f32 %v1117, %v1205
      %1207 = vmatmul.bf16.gmra.mxu0 %v600
      %v1208 = vpop.f32.mrf.mxu0
      %v1209 = vadd.f32 %v1120, %v1208
      %v1210 = vpop.f32.mrf.mxu0
      %v1211 = vadd.f32 %v1122, %v1210
      %1212 = vdwg.mxu0
      %1213 = vst [vmem:[%s211] sm:$0xff] %v1134
      %1214 = vst [vmem:[%s211 + $0x8] sm:$0xff] %v1136
      %1215 = vst [vmem:[%s211 + $0x10] sm:$0xff] %v1139
      %1216 = vst [vmem:[%s211 + $0x18] sm:$0xff] %v1141
      %1217 = vst [vmem:[%s211 + $0x20] sm:$0xff] %v1144
      %1218 = vst [vmem:[%s211 + $0x28] sm:$0xff] %v1146
      %1219 = vst [vmem:[%s211 + $0x30] sm:$0xff] %v1149
      %1220 = vst [vmem:[%s211 + $0x38] sm:$0xff] %v1151
      %1221 = vst [vmem:[%s211 + $0x40] sm:$0xff] %v1154
      %1222 = vst [vmem:[%s211 + $0x48] sm:$0xff] %v1156
      %1223 = vst [vmem:[%s211 + $0x50] sm:$0xff] %v1159
      %1224 = vst [vmem:[%s211 + $0x58] sm:$0xff] %v1161
      %1225 = vst [vmem:[%s211 + $0x60] sm:$0xff] %v1164
      %1226 = vst [vmem:[%s211 + $0x68] sm:$0xff] %v1166
      %1227 = vst [vmem:[%s211 + $0x70] sm:$0xff] %v1169
      %1228 = vst [vmem:[%s211 + $0x78] sm:$0xff] %v1171
      %1229 = vst [vmem:[%s211 + $0x80] sm:$0xff] %v1174
      %1230 = vst [vmem:[%s211 + $0x88] sm:$0xff] %v1176
      %1231 = vst [vmem:[%s211 + $0x90] sm:$0xff] %v1179
      %1232 = vst [vmem:[%s211 + $0x98] sm:$0xff] %v1181
      %1233 = vst [vmem:[%s211 + $0xa0] sm:$0xff] %v1184
      %1234 = vst [vmem:[%s211 + $0xa8] sm:$0xff] %v1186
      %1235 = vst [vmem:[%s211 + $0xb0] sm:$0xff] %v1189
      %1236 = vst [vmem:[%s211 + $0xb8] sm:$0xff] %v1191
      %1237 = vst [vmem:[%s211 + $0xc0] sm:$0xff] %v1194
      %1238 = vst [vmem:[%s211 + $0xc8] sm:$0xff] %v1196
      %1239 = vst [vmem:[%s211 + $0xd0] sm:$0xff] %v1199
      %1240 = vst [vmem:[%s211 + $0xd8] sm:$0xff] %v1201
      %1241 = vst [vmem:[%s211 + $0xe0] sm:$0xff] %v1204
      %1242 = vst [vmem:[%s211 + $0xe8] sm:$0xff] %v1206
      %1243 = vst [vmem:[%s211 + $0xf0] sm:$0xff] %v1209
      %1244 = vst [vmem:[%s211 + $0xf8] sm:$0xff] %v1211
      %s1245 = smul.u32 32, %s19
      %p1246 = scmp.lt.s32.totalorder %s18, 1
      %s1247 = scalar_select %p1246, %s18, 1
      %p1248 = scmp.lt.s32.totalorder %s1245, 31
      %s1249 = scalar_select %p1248, %s1245, 31
      %s1250 = smul.addr %s1247, 32
      %s1251 = sadd.s32 %s1249, %s1250
      %s1252 = smul.addr %s1251, 8
      %s1253 = scalar_lea.vmem %s3, %s1252
      // Predicated region
      $region33: #{inception_block_v1_forward.1} parent=31 // pred_check
        %p1254 = pneg %p116
      $region34: #{inception_block_v1_forward.1} parent=31 // pred_check_branch
        %1256 = sbr.rel (%p1254) target = $region36
      $region35: #{inception_block_v1_forward.1} parent=31 // pred_region
        %s1257 = smul.u32 32, %s19
      $region36: #{inception_block_v1_forward.1} parent=31 // pred_fallthru
        _
    $region32: #{inception_block_v1_forward.1} parent=5 // pred_fallthru
      _
    %p1258 = scmp.le.s32.totalorder 2, %s9
    // Predicated region
    $region37: #{inception_block_v1_forward.1} parent=5 // pred_check
      %p1259 = pneg %p1258
    $region38: #{inception_block_v1_forward.1} parent=5 // pred_check_branch
      %1261 = sbr.rel (%p1259) target = $region40
    $region39: #{inception_block_v1_forward.1} parent=5 // pred_region
      %s1262 = ssub.s32 %s9, 2
      // Predicated region
      $region41: #{inception_block_v1_forward.1} parent=39 // pred_check
        %p1263 = pneg %p122
      $region42: #{inception_block_v1_forward.1} parent=39 // pred_check_branch
        %1265 = sbr.rel (%p1263) target = $region44
      $region43: #{inception_block_v1_forward.1} parent=39 // pred_region
        %s1266 = smul.u32 32, %s21
        %p1267 = scmp.lt.s32.totalorder %s20, 1
        %s1268 = scalar_select %p1267, %s20, 1
        %p1269 = scmp.lt.s32.totalorder %s1266, 31
        %s1270 = scalar_select %p1269, %s1266, 31
        %s1271 = smul.addr %s1268, 32
        %s1272 = sadd.s32 %s1270, %s1271
        %s1273 = smul.addr %s1272, 8
        %s1274 = scalar_lea.vmem %s3, %s1273
      $region44: #{inception_block_v1_forward.1} parent=39 // pred_fallthru
        _
    $region40: #{inception_block_v1_forward.1} parent=5 // pred_fallthru
      _
  $region6: #{inception_block_v1_forward.1} parent=0 // loop_footer
    %s13 = sadd.s32 1, %s9
  $region7: #{inception_block_v1_forward.1} parent=0 // loop_footer_branch
    %8 = sbr.rel target = $region3
  $region8: #{inception_block_v1_forward.1} parent=0 // loop_exit
    _

</llo_original>
